<compile_context>
chip_gen: v6e
topology: v6e:2x2x1
jax: 0.10.0
libtpu: 0.0.40
codegen_flags: <defaults>
</compile_context>

<pallas_src>
import jax
import jax.numpy as jnp
from jax.experimental import pallas as pl
from jax.experimental.pallas import tpu as pltpu

HIDDEN = 256        # matches nn.Linear(*, 256) in the PyTorch module
TB_TARGET = 2048    # batch-tile rows for large (replay-buffer-sized) batches


def c_critic_kernel(state_ref, action_ref,
                    w1_ref, b1_ref, w2_ref, b2_ref, w3_ref, b3_ref,
                    out_ref):
    """One (TB, ...) batch tile: 3 bf16 MXU matmuls, f32 accumulate/relu/reduce.

    Output block is lane-dense (1, TB); the (TB,)->row relayout rides the XLU.
    """
    x = state_ref[...].astype(jnp.bfloat16)            # (TB, S) bf16
    a = action_ref[...]                                # (TB, A) f32

    h1 = jnp.dot(x, w1_ref[...], preferred_element_type=jnp.float32) + b1_ref[...]
    h1 = jnp.maximum(h1, 0.0).astype(jnp.bfloat16)     # (TB, 256)

    h2 = jnp.dot(h1, w2_ref[...], preferred_element_type=jnp.float32) + b2_ref[...]
    h2 = jnp.maximum(h2, 0.0)                          # (TB, 256) f32

    # Lane-dense layer 3 + rowwise dot with action:
    #   out = sum_a (h2 @ W3^T + b3)_a * action_a
    #       = sum_k h2_k * (action @ W3)_k + sum_a action_a * b3_a
    t = jnp.dot(a.astype(jnp.bfloat16), w3_ref[...],
                preferred_element_type=jnp.float32)    # (TB, 256) f32

    row = (jnp.sum(h2 * t, axis=-1)
           + jnp.sum(a * b3_ref[...], axis=-1))        # (TB,) f32
    out_ref[0, :] = row                                # lane-dense store


def prepare_params(params):
    """One-time (hoisted) conversion of PyTorch-layout params to kernel layout."""
    w1, b1, w2, b2, w3, b3 = params
    return (w1.T.astype(jnp.bfloat16),                 # (S, 256)
            b1.reshape(1, -1).astype(jnp.float32),     # (1, 256)
            w2.T.astype(jnp.bfloat16),                 # (256, 256)
            b2.reshape(1, -1).astype(jnp.float32),     # (1, 256)
            w3.astype(jnp.bfloat16),                   # (A, 256) torch (out,in) kept: action @ W3
            b3.reshape(1, -1).astype(jnp.float32))     # (1, A)


def _round_up(x, m):
    return ((x + m - 1) // m) * m


def _choose_tile(B):
    """Batch-tile rows. Big tiles amortize per-grid-step overhead; keep >= 2 steps
    for 1k < B < 2*TB so v7x megacore can shard the batch axis; small batches get a
    single tile rounded to 16 rows (bf16 (16,128) min tile, avoids sublane relayout)."""
    if B >= 2 * TB_TARGET:
        return TB_TARGET
    if B > 1024:
        return min(TB_TARGET, _round_up(pl.cdiv(B, 2), 128))
    return _round_up(max(B, 1), 16)


def _padded_bytes(rows, cols, itemsize):
    """VMEM footprint of one buffer after (8, 128) tile padding."""
    return _round_up(max(rows, 1), 8) * _round_up(max(cols, 1), 128) * itemsize


def _vmem_limit_bytes(tb, S, A):
    """Size the scoped-VMEM limit from the real footprint (+50% headroom)."""
    io = 2 * (_padded_bytes(tb, S, 4)            # state, double-buffered
              + _padded_bytes(tb, A, 4)          # action
              + _padded_bytes(1, tb, 4))         # lane-dense out row
    weights = 2 * (_padded_bytes(S, HIDDEN, 2)
                   + _padded_bytes(HIDDEN, HIDDEN, 2)
                   + _padded_bytes(A, HIDDEN, 2)
                   + 2 * _padded_bytes(1, HIDDEN, 4)
                   + _padded_bytes(1, A, 4))
    temps = _padded_bytes(tb, HIDDEN, 2) + 3 * _padded_bytes(tb, HIDDEN, 4)
    est = int(1.5 * (io + weights + temps))
    return max(16 << 20, min(est, 32 << 20))     # stay well under v7x's 64 MiB


@jax.jit
def c_critic_forward(state, action, kparams):
    """state: (B, S) f32, action: (B, A) f32, kparams from prepare_params -> (B, 1) f32."""
    B, S = state.shape
    A = action.shape[1]
    w1, b1, w2, b2, w3, b3 = kparams

    tb = _choose_tile(B)
    num_tiles = pl.cdiv(B, tb)
    b_pad = num_tiles * tb                       # logical output width only; inputs NOT padded

    batch_spec = lambda cols: pl.BlockSpec((tb, cols), lambda i: (i, 0))
    resident = lambda shape: pl.BlockSpec(shape, lambda i: (0, 0))   # weights stay in VMEM

    flops = 2 * b_pad * (S * HIDDEN + HIDDEN * HIDDEN + HIDDEN * A) \
        + 4 * b_pad * (HIDDEN + A)
    bytes_accessed = (b_pad * (S + A + 1) * 4                              # state/action/out f32
                      + (S * HIDDEN + HIDDEN * HIDDEN + A * HIDDEN) * 2    # bf16 weights
                      + (2 * HIDDEN + A) * 4)                              # f32 biases

    out = pl.pallas_call(
        c_critic_kernel,
        out_shape=jax.ShapeDtypeStruct((1, b_pad), jnp.float32),   # lane-dense output slab
        grid=(num_tiles,),
        in_specs=[
            batch_spec(S),                # state  (TB, S)   (ragged last block OK: rows independent)
            batch_spec(A),                # action (TB, A)
            resident((S, HIDDEN)),        # w1
            resident((1, HIDDEN)),        # b1
            resident((HIDDEN, HIDDEN)),   # w2
            resident((1, HIDDEN)),        # b2
            resident((A, HIDDEN)),        # w3 (torch layout)
            resident((1, A)),             # b3
        ],
        out_specs=pl.BlockSpec((1, tb), lambda i: (0, i)),
        compiler_params=pltpu.CompilerParams(
            dimension_semantics=("parallel",),                     # megacore sharding on v7x
            vmem_limit_bytes=_vmem_limit_bytes(tb, S, A)),
        cost_estimate=pl.CostEstimate(
            flops=flops, transcendentals=0, bytes_accessed=bytes_accessed),
    )(state, action, w1, b1, w2, b2, w3, b3)

    flat = out[0]                                # (b_pad,)  -- free reshape
    if b_pad != B:
        flat = flat[:B]                          # drop lanes written by ragged/OOB rows
    return flat.reshape(B, 1)


def init_params(key, state_dim, action_dim, hidden=HIDDEN):
    """Deterministic synthetic params with PyTorch Linear shapes: W (out, in), b (out,)."""
    ks = jax.random.split(key, 6)

    def lin(kw, kb, out_f, in_f):
        bound = 1.0 / jnp.sqrt(in_f)
        w = jax.random.uniform(kw, (out_f, in_f), jnp.float32, -bound, bound)
        b = jax.random.uniform(kb, (out_f,), jnp.float32, -bound, bound)
        return w, b

    w1, b1 = lin(ks[0], ks[1], hidden, state_dim)
    w2, b2 = lin(ks[2], ks[3], hidden, hidden)
    w3, b3 = lin(ks[4], ks[5], action_dim, hidden)
    return (w1, b1, w2, b2, w3, b3)


def c_critic_reference(state, action, params):
    """Pure f32 reference matching the PyTorch module exactly."""
    w1, b1, w2, b2, w3, b3 = params
    g = jnp.maximum(state @ w1.T + b1, 0.0)
    g = jnp.maximum(g @ w2.T + b2, 0.0)
    g = g @ w3.T + b3
    return jnp.sum(g * action, axis=-1, keepdims=True)


if __name__ == "__main__":
    STATE_DIM, ACTION_DIM = 16, 8

    key = jax.random.PRNGKey(0)
    k_p, k_data = jax.random.split(key)
    params = init_params(k_p, STATE_DIM, ACTION_DIM)
    kparams = prepare_params(params)   # hoisted one-time transpose + bf16 cast

    # Tiny batch (single ragged tile), mid batch (single tile), and a multi-tile
    # batch with a ragged last block to exercise the grid / lane-dense-output path.
    for B in (4, 333, 2600):
        k_s, k_a = jax.random.split(jax.random.fold_in(k_data, B))
        state = jax.random.normal(k_s, (B, STATE_DIM), jnp.float32)
        action = jax.random.normal(k_a, (B, ACTION_DIM), jnp.float32)

        out = jax.block_until_ready(c_critic_forward(state, action, kparams))
        ref = c_critic_reference(state, action, params)

        assert out.shape == (B, 1), out.shape
        err = float(jnp.max(jnp.abs(out - ref)))
        scale = float(jnp.max(jnp.abs(ref))) + 1e-6
        # bf16 matmuls with f32 accumulation: allow ~5e-2 relative-to-max error.
        assert err <= 5e-2 * scale, (B, err, scale)

    print("KERNEL_OK")
</pallas_src>

<mosaic_0001>
module attributes {stable_mosaic.version = 11 : i64} {
  func.func @c_critic_kernel(%arg0: i32, %arg1: memref<16x16xf32, #tpu.memory_space<vmem>>, %arg2: memref<16x8xf32, #tpu.memory_space<vmem>>, %arg3: memref<16x256xbf16, #tpu.memory_space<vmem>>, %arg4: memref<1x256xf32, #tpu.memory_space<vmem>>, %arg5: memref<256x256xbf16, #tpu.memory_space<vmem>>, %arg6: memref<1x256xf32, #tpu.memory_space<vmem>>, %arg7: memref<8x256xbf16, #tpu.memory_space<vmem>>, %arg8: memref<1x8xf32, #tpu.memory_space<vmem>>, %arg9: memref<1x16xf32, #tpu.memory_space<vmem>>) attributes {dimension_semantics = [#tpu.dimension_semantics<parallel>], iteration_bounds = array<i64: 1>, scalar_prefetch = 0 : i64, scratch_operands = 0 : i64, tpu.core_type = #tpu.core_type<tc>, window_params = [{transform_indices = @transform_0, window_bounds = array<i64: 16, 16>}, {transform_indices = @transform_1, window_bounds = array<i64: 16, 8>}, {pipeline_mode = #tpu.pipeline_mode<synchronous>, transform_indices = @transform_2, window_bounds = array<i64: 16, 256>}, {pipeline_mode = #tpu.pipeline_mode<synchronous>, transform_indices = @transform_3, window_bounds = array<i64: 1, 256>}, {pipeline_mode = #tpu.pipeline_mode<synchronous>, transform_indices = @transform_4, window_bounds = array<i64: 256, 256>}, {pipeline_mode = #tpu.pipeline_mode<synchronous>, transform_indices = @transform_5, window_bounds = array<i64: 1, 256>}, {pipeline_mode = #tpu.pipeline_mode<synchronous>, transform_indices = @transform_6, window_bounds = array<i64: 8, 256>}, {pipeline_mode = #tpu.pipeline_mode<synchronous>, transform_indices = @transform_7, window_bounds = array<i64: 1, 8>}, {transform_indices = @transform_8, window_bounds = array<i64: 1, 16>}]} {
    %c0 = arith.constant 0 : index
    %c0_0 = arith.constant 0 : index
    %0 = vector.load %arg1[%c0, %c0_0] : memref<16x16xf32, #tpu.memory_space<vmem>>, vector<16x16xf32>
    %1 = arith.truncf %0 : vector<16x16xf32> to vector<16x16xbf16>
    %c0_1 = arith.constant 0 : index
    %c0_2 = arith.constant 0 : index
    %2 = vector.load %arg2[%c0_1, %c0_2] : memref<16x8xf32, #tpu.memory_space<vmem>>, vector<16x8xf32>
    %c0_3 = arith.constant 0 : index
    %c0_4 = arith.constant 0 : index
    %3 = vector.load %arg3[%c0_3, %c0_4] : memref<16x256xbf16, #tpu.memory_space<vmem>>, vector<16x256xbf16>
    %cst = arith.constant dense<0.000000e+00> : vector<16x256xf32>
    %4 = tpu.matmul %1, %3, %cst {dimension_numbers = #tpu.dot_dimension_numbers<[1], [0], [0], [1], [0, 0, 1, 1], [], []>} : vector<16x16xbf16>, vector<16x256xbf16>, vector<16x256xf32> -> vector<16x256xf32>
    %c0_5 = arith.constant 0 : index
    %c0_6 = arith.constant 0 : index
    %5 = vector.load %arg4[%c0_5, %c0_6] : memref<1x256xf32, #tpu.memory_space<vmem>>, vector<1x256xf32>
    %6 = vector.broadcast %5 : vector<1x256xf32> to vector<16x256xf32>
    %7 = arith.addf %4, %6 : vector<16x256xf32>
    %cst_7 = arith.constant 0.000000e+00 : f32
    %8 = vector.broadcast %cst_7 : f32 to vector<16x256xf32>
    %9 = arith.maximumf %7, %8 : vector<16x256xf32>
    %10 = arith.truncf %9 : vector<16x256xf32> to vector<16x256xbf16>
    %c0_8 = arith.constant 0 : index
    %c0_9 = arith.constant 0 : index
    %11 = vector.load %arg5[%c0_8, %c0_9] : memref<256x256xbf16, #tpu.memory_space<vmem>>, vector<256x256xbf16>
    %cst_10 = arith.constant dense<0.000000e+00> : vector<16x256xf32>
    %12 = tpu.matmul %10, %11, %cst_10 {dimension_numbers = #tpu.dot_dimension_numbers<[1], [0], [0], [1], [0, 0, 1, 1], [], []>} : vector<16x256xbf16>, vector<256x256xbf16>, vector<16x256xf32> -> vector<16x256xf32>
    %c0_11 = arith.constant 0 : index
    %c0_12 = arith.constant 0 : index
    %13 = vector.load %arg6[%c0_11, %c0_12] : memref<1x256xf32, #tpu.memory_space<vmem>>, vector<1x256xf32>
    %14 = vector.broadcast %13 : vector<1x256xf32> to vector<16x256xf32>
    %15 = arith.addf %12, %14 : vector<16x256xf32>
    %cst_13 = arith.constant 0.000000e+00 : f32
    %16 = vector.broadcast %cst_13 : f32 to vector<16x256xf32>
    %17 = arith.maximumf %15, %16 : vector<16x256xf32>
    %18 = arith.truncf %2 : vector<16x8xf32> to vector<16x8xbf16>
    %c0_14 = arith.constant 0 : index
    %c0_15 = arith.constant 0 : index
    %19 = vector.load %arg7[%c0_14, %c0_15] : memref<8x256xbf16, #tpu.memory_space<vmem>>, vector<8x256xbf16>
    %cst_16 = arith.constant dense<0.000000e+00> : vector<16x256xf32>
    %20 = tpu.matmul %18, %19, %cst_16 {dimension_numbers = #tpu.dot_dimension_numbers<[1], [0], [0], [1], [0, 0, 1, 1], [], []>} : vector<16x8xbf16>, vector<8x256xbf16>, vector<16x256xf32> -> vector<16x256xf32>
    %21 = arith.mulf %17, %20 : vector<16x256xf32>
    %cst_17 = arith.constant dense<0.000000e+00> : vector<16xf32>
    %22 = vector.multi_reduction <add>, %21, %cst_17 [1] : vector<16x256xf32> to vector<16xf32>
    %c0_18 = arith.constant 0 : index
    %c0_19 = arith.constant 0 : index
    %23 = vector.load %arg8[%c0_18, %c0_19] : memref<1x8xf32, #tpu.memory_space<vmem>>, vector<1x8xf32>
    %24 = vector.broadcast %23 : vector<1x8xf32> to vector<16x8xf32>
    %25 = arith.mulf %2, %24 : vector<16x8xf32>
    %cst_20 = arith.constant dense<0.000000e+00> : vector<16xf32>
    %26 = vector.multi_reduction <add>, %25, %cst_20 [1] : vector<16x8xf32> to vector<16xf32>
    %27 = arith.addf %22, %26 : vector<16xf32>
    %c0_21 = arith.constant 0 : index
    %c0_22 = arith.constant 0 : index
    %28 = vector.load %arg9[%c0_21, %c0_22] : memref<1x16xf32, #tpu.memory_space<vmem>>, vector<1x16xf32>
    %29 = vector.shape_cast %28 : vector<1x16xf32> to vector<16xf32>
    %30 = vector.shape_cast %27 : vector<16xf32> to vector<1x16xf32>
    tpu.vector_store %arg9[%c0_21, %c0_22], %30 {strides = array<i32>} : memref<1x16xf32, #tpu.memory_space<vmem>>, vector<1x16xf32>,
    return
  }
  func.func @transform_0(%arg0: i32) -> (i32, i32) {
    %c0_i32 = arith.constant 0 : i32
    %c0_i32_0 = arith.constant 0 : i32
    return %arg0, %c0_i32 : i32, i32
  }
  func.func @transform_1(%arg0: i32) -> (i32, i32) {
    %c0_i32 = arith.constant 0 : i32
    %c0_i32_0 = arith.constant 0 : i32
    return %arg0, %c0_i32 : i32, i32
  }
  func.func @transform_2(%arg0: i32) -> (i32, i32) {
    %c0_i32 = arith.constant 0 : i32
    %c0_i32_0 = arith.constant 0 : i32
    %c0_i32_1 = arith.constant 0 : i32
    return %c0_i32, %c0_i32_0 : i32, i32
  }
  func.func @transform_3(%arg0: i32) -> (i32, i32) {
    %c0_i32 = arith.constant 0 : i32
    %c0_i32_0 = arith.constant 0 : i32
    %c0_i32_1 = arith.constant 0 : i32
    return %c0_i32, %c0_i32_0 : i32, i32
  }
  func.func @transform_4(%arg0: i32) -> (i32, i32) {
    %c0_i32 = arith.constant 0 : i32
    %c0_i32_0 = arith.constant 0 : i32
    %c0_i32_1 = arith.constant 0 : i32
    return %c0_i32, %c0_i32_0 : i32, i32
  }
  func.func @transform_5(%arg0: i32) -> (i32, i32) {
    %c0_i32 = arith.constant 0 : i32
    %c0_i32_0 = arith.constant 0 : i32
    %c0_i32_1 = arith.constant 0 : i32
    return %c0_i32, %c0_i32_0 : i32, i32
  }
  func.func @transform_6(%arg0: i32) -> (i32, i32) {
    %c0_i32 = arith.constant 0 : i32
    %c0_i32_0 = arith.constant 0 : i32
    %c0_i32_1 = arith.constant 0 : i32
    return %c0_i32, %c0_i32_0 : i32, i32
  }
  func.func @transform_7(%arg0: i32) -> (i32, i32) {
    %c0_i32 = arith.constant 0 : i32
    %c0_i32_0 = arith.constant 0 : i32
    %c0_i32_1 = arith.constant 0 : i32
    return %c0_i32, %c0_i32_0 : i32, i32
  }
  func.func @transform_8(%arg0: i32) -> (i32, i32) {
    %c0_i32 = arith.constant 0 : i32
    %c0_i32_0 = arith.constant 0 : i32
    return %c0_i32, %arg0 : i32, i32
  }
}

</mosaic_0001>

<llo_original>
// kernel: c_critic_forward.1
$region0: #{c_critic_forward.1}
  #allocation0 [shape = 'u32[]', space=smem, size = 0x4, offset = 0x4, fixed_abs, tag = 'smem constant byte address 0x4 - core index']
  #allocation1 [shape = 'u32[144,128]{1,0:T(1,128)}', space=vmem, size = 0x12000, scoped, tag = 'internal scratch']
  %s0 = inlined_call_operand.hbm [shape: f32[4,16], index: 0, kind: input, shape index: {}]
  %s1 = inlined_call_operand.hbm [shape: f32[4,8], index: 1, kind: input, shape index: {}]
  %s2 = inlined_call_operand.hbm [shape: bf16[16,256], index: 2, kind: input, shape index: {}]
  %s3 = inlined_call_operand.vmem [shape: f32[1,256], index: 3, kind: input, shape index: {}]
  %s4 = inlined_call_operand.hbm [shape: bf16[256,256], index: 4, kind: input, shape index: {}]
  %s5 = inlined_call_operand.hbm [shape: f32[1,256], index: 5, kind: input, shape index: {}]
  %s6 = inlined_call_operand.vmem [shape: bf16[8,256], index: 6, kind: input, shape index: {}]
  %s7 = inlined_call_operand.vmem [shape: f32[1,8], index: 7, kind: input, shape index: {}]
  %s8 = inlined_call_operand.vmem [shape: f32[1,16], index: 8, kind: output, shape index: {}]
  %s9 = sld [smem:[#allocation0]]
  $region62: #{c_critic_forward.1} parent=0
    _
  %s11 = ssub.s32 1, %s9
  %s12 = scalar_select 0, %s11, %s9
  $region1: #{c_critic_forward.1} parent=0
    #allocation2 [shape = 'u8[8192]{0}', space=vmem, size = 0x2000, scoped, tag = 'input window, operand 0, single buffered']
    #allocation3 [shape = 's32[1]{0}', space=sflag, size = 0x4, scoped, tag = 'scoped memory for c_critic_forward.1']
    #allocation4 [shape = 'u8[8192]{0}', space=vmem, size = 0x2000, scoped, tag = 'input window, operand 1, single buffered']
    #allocation5 [shape = 's32[1]{0}', space=sflag, size = 0x4, scoped, tag = 'scoped memory for c_critic_forward.1']
    #allocation6 [shape = 'u8[8192]{0}', space=vmem, size = 0x2000, scoped, tag = 'input window, operand 2, single buffered']
    #allocation7 [shape = 'u8[131072]{0}', space=vmem, size = 0x20000, scoped, tag = 'input window, operand 4, single buffered']
    #allocation8 [shape = 's32[1]{0}', space=sflag, size = 0x4, scoped, tag = 'scoped memory for c_critic_forward.1']
    #allocation9 [shape = 'u8[1024]{0}', space=vmem, size = 0x400, scoped, tag = 'input window, operand 5, single buffered']
    %13 = vsyncpa [#allocation3], 0
    %14 = vsyncpa [#allocation5], 0
    %15 = vsyncpa [#allocation8], 0
    // Predicated region
    $region2: #{c_critic_forward.1} parent=1 // pred_check
      _
    $region3: #{c_critic_forward.1} parent=1 // pred_check_branch
      %17 = sbr.rel (0) target = $region5
    $region4: #{c_critic_forward.1} parent=1 // pred_region
      %s19 = ssub.s32 256, 64
      %20 = vsyncadd [#allocation3], %s19
      %s21 = sshll.u32 [#allocation2], 4
      %s22 = int_to_ptr.vmem [resolvable:$true] %s21
      %27 = dma.hbm_to_vmem [thread:$0]  %s0, 64, %s22, [#allocation3], 64, 64, 4
    $region5: #{c_critic_forward.1} parent=1 // pred_fallthru
      _
    // Predicated region
    $region6: #{c_critic_forward.1} parent=1 // pred_check
      _
    $region7: #{c_critic_forward.1} parent=1 // pred_check_branch
      %29 = sbr.rel (0) target = $region9
    $region8: #{c_critic_forward.1} parent=1 // pred_region
      %s31 = ssub.s32 256, 64
      %32 = vsyncadd [#allocation5], %s31
      %s33 = sshll.u32 [#allocation4], 4
      %s34 = int_to_ptr.vmem [resolvable:$true] %s33
      %39 = dma.hbm_to_vmem [thread:$0]  %s1, 64, %s34, [#allocation5], 64, 64, 4
    $region9: #{c_critic_forward.1} parent=1 // pred_fallthru
      _
    // Predicated region
    $region10: #{c_critic_forward.1} parent=1 // pred_check
      _
    $region11: #{c_critic_forward.1} parent=1 // pred_check_branch
      %41 = sbr.rel (0) target = $region13
    $region12: #{c_critic_forward.1} parent=1 // pred_region
      %s43 = ssub.s32 256, 256
      %44 = vsyncadd [#allocation5], %s43
      %s45 = sshll.u32 [#allocation6], 4
      %s46 = int_to_ptr.vmem [resolvable:$true] %s45
      %51 = dma.hbm_to_vmem [thread:$0]  %s2, 256, %s46, [#allocation5], 128, 128, 8
    $region13: #{c_critic_forward.1} parent=1 // pred_fallthru
      _
    // Predicated region
    $region14: #{c_critic_forward.1} parent=1 // pred_check
      _
    $region15: #{c_critic_forward.1} parent=1 // pred_check_branch
      %53 = sbr.rel (0) target = $region17
    $region16: #{c_critic_forward.1} parent=1 // pred_region
      _
    $region17: #{c_critic_forward.1} parent=1 // pred_fallthru
      _
    // Predicated region
    $region18: #{c_critic_forward.1} parent=1 // pred_check
      _
    $region19: #{c_critic_forward.1} parent=1 // pred_check_branch
      %55 = sbr.rel (0) target = $region21
    $region20: #{c_critic_forward.1} parent=1 // pred_region
      %s57 = ssub.s32 4096, 4096
      %58 = vsyncadd [#allocation8], %s57
      %s59 = sshll.u32 [#allocation7], 4
      %s60 = int_to_ptr.vmem [resolvable:$true] %s59
      %65 = dma.hbm_to_vmem [thread:$0]  %s4, 4096, %s60, [#allocation8], 128, 128, 8
    $region21: #{c_critic_forward.1} parent=1 // pred_fallthru
      _
    // Predicated region
    $region22: #{c_critic_forward.1} parent=1 // pred_check
      _
    $region23: #{c_critic_forward.1} parent=1 // pred_check_branch
      %67 = sbr.rel (0) target = $region25
    $region24: #{c_critic_forward.1} parent=1 // pred_region
      %s69 = ssub.s32 32, 32
      %70 = vsyncadd [#allocation8], %s69
      %s72 = sshll.u32 [#allocation9], 4
      %s73 = int_to_ptr.vmem [resolvable:$true] %s72
      %75 = dma.hbm_to_vmem [thread:$0]  %s5, 32, %s73, [#allocation8]
    $region25: #{c_critic_forward.1} parent=1 // pred_fallthru
      _
    // Predicated region
    $region26: #{c_critic_forward.1} parent=1 // pred_check
      _
    $region27: #{c_critic_forward.1} parent=1 // pred_check_branch
      %77 = sbr.rel (0) target = $region29
    $region28: #{c_critic_forward.1} parent=1 // pred_region
      _
    $region29: #{c_critic_forward.1} parent=1 // pred_fallthru
      _
    // Predicated region
    $region30: #{c_critic_forward.1} parent=1 // pred_check
      _
    $region31: #{c_critic_forward.1} parent=1 // pred_check_branch
      %79 = sbr.rel (0) target = $region33
    $region32: #{c_critic_forward.1} parent=1 // pred_region
      _
    $region33: #{c_critic_forward.1} parent=1 // pred_fallthru
      _
    // Predicated region
    $region34: #{c_critic_forward.1} parent=1 // pred_check
      _
    $region35: #{c_critic_forward.1} parent=1 // pred_check_branch
      %81 = sbr.rel (0) target = $region37
    $region36: #{c_critic_forward.1} parent=1 // pred_region
      %82 = dma.done [#allocation3], 256
    $region37: #{c_critic_forward.1} parent=1 // pred_fallthru
      _
    // Predicated region
    $region38: #{c_critic_forward.1} parent=1 // pred_check
      _
    $region39: #{c_critic_forward.1} parent=1 // pred_check_branch
      %84 = sbr.rel (0) target = $region41
    $region40: #{c_critic_forward.1} parent=1 // pred_region
      %85 = dma.done [#allocation5], 256
    $region41: #{c_critic_forward.1} parent=1 // pred_fallthru
      _
    // Predicated region
    $region42: #{c_critic_forward.1} parent=1 // pred_check
      _
    $region43: #{c_critic_forward.1} parent=1 // pred_check_branch
      %87 = sbr.rel (0) target = $region45
    $region44: #{c_critic_forward.1} parent=1 // pred_region
      %88 = dma.done [#allocation5], 256
    $region45: #{c_critic_forward.1} parent=1 // pred_fallthru
      _
    // Predicated region
    $region46: #{c_critic_forward.1} parent=1 // pred_check
      _
    $region47: #{c_critic_forward.1} parent=1 // pred_check_branch
      %90 = sbr.rel (0) target = $region49
    $region48: #{c_critic_forward.1} parent=1 // pred_region
      %91 = dma.done [#allocation8], 4096
    $region49: #{c_critic_forward.1} parent=1 // pred_fallthru
      _
    // Predicated region
    $region50: #{c_critic_forward.1} parent=1 // pred_check
      _
    $region51: #{c_critic_forward.1} parent=1 // pred_check_branch
      %93 = sbr.rel (0) target = $region53
    $region52: #{c_critic_forward.1} parent=1 // pred_region
      %94 = dma.done [#allocation8], 32
    $region53: #{c_critic_forward.1} parent=1 // pred_fallthru
      _
    %v96 = vld [vmem:[#allocation2] sm:$0xff]
    %v97 = vld [vmem:[#allocation2 + $0x8] sm:$0xff]
    %v98 = vpack.c.bf16 %v97, %v96
    %v99 = vld [vmem:[#allocation4] sm:$0xff]
    %v100 = vld [vmem:[#allocation4 + $0x8] sm:$0xff]
    %v101 = vld [vmem:[#allocation6] sm:$0xff]
    %v102 = vld [vmem:[#allocation6 + $0x8] sm:$0xff]
    %v103 = vld [vmem:[%s3] sm:$0x3]
    %v105 = vlaneseq
    %v106 = vshrl.u32 %v105, 7
    %v107 = vsub.s32 0, %v106
    %v108 = vrot.slane %v103, %v107
    %v109 = vlaneseq
    %v110 = vshrl.u32 %v109, 7
    %v111 = vsub.s32 1, %v110
    %v112 = vrot.slane %v103, %v111
    %v117 = vunpack.c.l.b16 %v101
    %v118 = vunpack.c.h.b16 %v101
    %v119 = vunpack.c.l.b16 %v102
    %v120 = vunpack.c.h.b16 %v102
    %v121 = vpack.c.b16 %v119, %v117
    %v122 = vpack.c.b16 %v120, %v118
    %vm125 = vcmask 130048
    %v127 = vsel %vm125, %v98, 0
    %129 = vmatprep.subr.bf16.mxu0 0
    %130 = vmatpush1.bf16.msra.mxu0 0
    %131 = vmatprep.subr.bf16.mxu0 0
    %132 = vmatpush1.bf16.msra.mxu0 0
    %133 = vmatprep.subr.bf16.mxu0 0
    %134 = vmatpush1.bf16.msra.mxu0 0
    %135 = vmatprep.subr.bf16.mxu0 0
    %136 = vmatpush1.bf16.msra.mxu0 0
    %137 = vmatprep.subr.bf16.mxu0 0
    %138 = vmatpush1.bf16.msra.mxu0 0
    %139 = vmatprep.subr.bf16.mxu0 0
    %140 = vmatpush1.bf16.msra.mxu0 0
    %141 = vmatprep.subr.bf16.mxu0 0
    %142 = vmatpush1.bf16.msra.mxu0 0
    %143 = vmatprep.subr.bf16.mxu0 %v122
    %144 = vmatpush1.bf16.msra.mxu0 %v121
    %145 = vmatprep.subr.bf16.mxu0 0
    %146 = vmatpush2.bf16.msra.mxu0 0
    %147 = vmatprep.subr.bf16.mxu0 0
    %148 = vmatpush2.bf16.msra.mxu0 0
    %149 = vmatprep.subr.bf16.mxu0 0
    %150 = vmatpush2.bf16.msra.mxu0 0
    %151 = vmatprep.subr.bf16.mxu0 0
    %152 = vmatpush2.bf16.msra.mxu0 0
    %153 = vmatprep.subr.bf16.mxu0 0
    %154 = vmatpush2.bf16.msra.mxu0 0
    %155 = vmatprep.subr.bf16.mxu0 0
    %156 = vmatpush2.bf16.msra.mxu0 0
    %157 = vmatprep.subr.bf16.mxu0 0
    %158 = vmatpush2.bf16.msra.mxu0 0
    %159 = vmatprep.subr.bf16.mxu0 0
    %160 = vmatpush2.bf16.msra.mxu0 0
    %161 = vmatprep.mubr.bf16.mxu0 0
    %162 = vmatmul.mubr.bf16.gmra.mxu0 %v127
    %v163 = vpop.f32.mrf.mxu0
    %v164 = vadd.f32 %v108, %v163
    %v165 = vpop.f32.mrf.mxu0
    %v166 = vadd.f32 %v112, %v165
    %v167 = vpop.f32.mrf.mxu0
    %v168 = vadd.f32 %v108, %v167
    %v169 = vpop.f32.mrf.mxu0
    %v170 = vadd.f32 %v112, %v169
    %171 = vdwg.mxu0
    %v172 = vmax.f32 %v164, 0.0
    %v173 = vmax.f32 %v166, 0.0
    %v174 = vmax.f32 %v168, 0.0
    %v175 = vmax.f32 %v170, 0.0
    %v176 = vpack.c.bf16 %v174, %v172
    %v177 = vpack.c.bf16 %v175, %v173
    %v178 = vld [vmem:[#allocation7] sm:$0xff]
    %v179 = vld [vmem:[#allocation7 + $0x8] sm:$0xff]
    %v180 = vld [vmem:[#allocation7 + $0x10] sm:$0xff]
    %v181 = vld [vmem:[#allocation7 + $0x18] sm:$0xff]
    %v182 = vld [vmem:[#allocation7 + $0x20] sm:$0xff]
    %v183 = vld [vmem:[#allocation7 + $0x28] sm:$0xff]
    %v184 = vld [vmem:[#allocation7 + $0x30] sm:$0xff]
    %v185 = vld [vmem:[#allocation7 + $0x38] sm:$0xff]
    %v186 = vld [vmem:[#allocation7 + $0x40] sm:$0xff]
    %v187 = vld [vmem:[#allocation7 + $0x48] sm:$0xff]
    %v188 = vld [vmem:[#allocation7 + $0x50] sm:$0xff]
    %v189 = vld [vmem:[#allocation7 + $0x58] sm:$0xff]
    %v190 = vld [vmem:[#allocation7 + $0x60] sm:$0xff]
    %v191 = vld [vmem:[#allocation7 + $0x68] sm:$0xff]
    %v192 = vld [vmem:[#allocation7 + $0x70] sm:$0xff]
    %v193 = vld [vmem:[#allocation7 + $0x78] sm:$0xff]
    %v194 = vld [vmem:[#allocation7 + $0x80] sm:$0xff]
    %v195 = vld [vmem:[#allocation7 + $0x88] sm:$0xff]
    %v196 = vld [vmem:[#allocation7 + $0x90] sm:$0xff]
    %v197 = vld [vmem:[#allocation7 + $0x98] sm:$0xff]
    %v198 = vld [vmem:[#allocation7 + $0xa0] sm:$0xff]
    %v199 = vld [vmem:[#allocation7 + $0xa8] sm:$0xff]
    %v200 = vld [vmem:[#allocation7 + $0xb0] sm:$0xff]
    %v201 = vld [vmem:[#allocation7 + $0xb8] sm:$0xff]
    %v202 = vld [vmem:[#allocation7 + $0xc0] sm:$0xff]
    %v203 = vld [vmem:[#allocation7 + $0xc8] sm:$0xff]
    %v204 = vld [vmem:[#allocation7 + $0xd0] sm:$0xff]
    %v205 = vld [vmem:[#allocation7 + $0xd8] sm:$0xff]
    %v206 = vld [vmem:[#allocation7 + $0xe0] sm:$0xff]
    %v207 = vld [vmem:[#allocation7 + $0xe8] sm:$0xff]
    %v208 = vld [vmem:[#allocation7 + $0xf0] sm:$0xff]
    %v209 = vld [vmem:[#allocation7 + $0xf8] sm:$0xff]
    %v210 = vld [vmem:[#allocation9] sm:$0x3]
    %v212 = vlaneseq
    %v213 = vshrl.u32 %v212, 7
    %v214 = vsub.s32 0, %v213
    %v215 = vrot.slane %v210, %v214
    %v216 = vlaneseq
    %v217 = vshrl.u32 %v216, 7
    %v218 = vsub.s32 1, %v217
    %v219 = vrot.slane %v210, %v218
    %v254 = vunpack.c.l.b16 %v178
    %v255 = vunpack.c.h.b16 %v178
    %v256 = vunpack.c.l.b16 %v179
    %v257 = vunpack.c.h.b16 %v179
    %v258 = vunpack.c.l.b16 %v180
    %v259 = vunpack.c.h.b16 %v180
    %v260 = vunpack.c.l.b16 %v181
    %v261 = vunpack.c.h.b16 %v181
    %v262 = vunpack.c.l.b16 %v182
    %v263 = vunpack.c.h.b16 %v182
    %v264 = vunpack.c.l.b16 %v183
    %v265 = vunpack.c.h.b16 %v183
    %v266 = vunpack.c.l.b16 %v184
    %v267 = vunpack.c.h.b16 %v184
    %v268 = vunpack.c.l.b16 %v185
    %v269 = vunpack.c.h.b16 %v185
    %v270 = vunpack.c.l.b16 %v186
    %v271 = vunpack.c.h.b16 %v186
    %v272 = vunpack.c.l.b16 %v187
    %v273 = vunpack.c.h.b16 %v187
    %v274 = vunpack.c.l.b16 %v188
    %v275 = vunpack.c.h.b16 %v188
    %v276 = vunpack.c.l.b16 %v189
    %v277 = vunpack.c.h.b16 %v189
    %v278 = vunpack.c.l.b16 %v190
    %v279 = vunpack.c.h.b16 %v190
    %v280 = vunpack.c.l.b16 %v191
    %v281 = vunpack.c.h.b16 %v191
    %v282 = vunpack.c.l.b16 %v192
    %v283 = vunpack.c.h.b16 %v192
    %v284 = vunpack.c.l.b16 %v193
    %v285 = vunpack.c.h.b16 %v193
    %v286 = vunpack.c.l.b16 %v194
    %v287 = vunpack.c.h.b16 %v194
    %v288 = vunpack.c.l.b16 %v195
    %v289 = vunpack.c.h.b16 %v195
    %v290 = vunpack.c.l.b16 %v196
    %v291 = vunpack.c.h.b16 %v196
    %v292 = vunpack.c.l.b16 %v197
    %v293 = vunpack.c.h.b16 %v197
    %v294 = vunpack.c.l.b16 %v198
    %v295 = vunpack.c.h.b16 %v198
    %v296 = vunpack.c.l.b16 %v199
    %v297 = vunpack.c.h.b16 %v199
    %v298 = vunpack.c.l.b16 %v200
    %v299 = vunpack.c.h.b16 %v200
    %v300 = vunpack.c.l.b16 %v201
    %v301 = vunpack.c.h.b16 %v201
    %v302 = vunpack.c.l.b16 %v202
    %v303 = vunpack.c.h.b16 %v202
    %v304 = vunpack.c.l.b16 %v203
    %v305 = vunpack.c.h.b16 %v203
    %v306 = vunpack.c.l.b16 %v204
    %v307 = vunpack.c.h.b16 %v204
    %v308 = vunpack.c.l.b16 %v205
    %v309 = vunpack.c.h.b16 %v205
    %v310 = vunpack.c.l.b16 %v206
    %v311 = vunpack.c.h.b16 %v206
    %v312 = vunpack.c.l.b16 %v207
    %v313 = vunpack.c.h.b16 %v207
    %v314 = vunpack.c.l.b16 %v208
    %v315 = vunpack.c.h.b16 %v208
    %v316 = vunpack.c.l.b16 %v209
    %v317 = vunpack.c.h.b16 %v209
    %v318 = vpack.c.b16 %v256, %v254
    %v319 = vpack.c.b16 %v257, %v255
    %v320 = vpack.c.b16 %v260, %v258
    %v321 = vpack.c.b16 %v261, %v259
    %v322 = vpack.c.b16 %v264, %v262
    %v323 = vpack.c.b16 %v265, %v263
    %v324 = vpack.c.b16 %v268, %v266
    %v325 = vpack.c.b16 %v269, %v267
    %v326 = vpack.c.b16 %v272, %v270
    %v327 = vpack.c.b16 %v273, %v271
    %v328 = vpack.c.b16 %v276, %v274
    %v329 = vpack.c.b16 %v277, %v275
    %v330 = vpack.c.b16 %v280, %v278
    %v331 = vpack.c.b16 %v281, %v279
    %v332 = vpack.c.b16 %v284, %v282
    %v333 = vpack.c.b16 %v285, %v283
    %v334 = vpack.c.b16 %v288, %v286
    %v335 = vpack.c.b16 %v289, %v287
    %v336 = vpack.c.b16 %v292, %v290
    %v337 = vpack.c.b16 %v293, %v291
    %v338 = vpack.c.b16 %v296, %v294
    %v339 = vpack.c.b16 %v297, %v295
    %v340 = vpack.c.b16 %v300, %v298
    %v341 = vpack.c.b16 %v301, %v299
    %v342 = vpack.c.b16 %v304, %v302
    %v343 = vpack.c.b16 %v305, %v303
    %v344 = vpack.c.b16 %v308, %v306
    %v345 = vpack.c.b16 %v309, %v307
    %v346 = vpack.c.b16 %v312, %v310
    %v347 = vpack.c.b16 %v313, %v311
    %v348 = vpack.c.b16 %v316, %v314
    %v349 = vpack.c.b16 %v317, %v315
    %382 = vmatprep.subr.bf16.mxu0 %v333
    %383 = vmatpush1.bf16.msra.mxu0 %v332
    %384 = vmatprep.subr.bf16.mxu0 %v331
    %385 = vmatpush1.bf16.msra.mxu0 %v330
    %386 = vmatprep.subr.bf16.mxu0 %v329
    %387 = vmatpush1.bf16.msra.mxu0 %v328
    %388 = vmatprep.subr.bf16.mxu0 %v327
    %389 = vmatpush1.bf16.msra.mxu0 %v326
    %390 = vmatprep.subr.bf16.mxu0 %v325
    %391 = vmatpush1.bf16.msra.mxu0 %v324
    %392 = vmatprep.subr.bf16.mxu0 %v323
    %393 = vmatpush1.bf16.msra.mxu0 %v322
    %394 = vmatprep.subr.bf16.mxu0 %v321
    %395 = vmatpush1.bf16.msra.mxu0 %v320
    %396 = vmatprep.subr.bf16.mxu0 %v319
    %397 = vmatpush1.bf16.msra.mxu0 %v318
    %398 = vmatprep.subr.bf16.mxu0 %v349
    %399 = vmatpush2.bf16.msra.mxu0 %v348
    %400 = vmatprep.subr.bf16.mxu0 %v347
    %401 = vmatpush2.bf16.msra.mxu0 %v346
    %402 = vmatprep.subr.bf16.mxu0 %v345
    %403 = vmatpush2.bf16.msra.mxu0 %v344
    %404 = vmatprep.subr.bf16.mxu0 %v343
    %405 = vmatpush2.bf16.msra.mxu0 %v342
    %406 = vmatprep.subr.bf16.mxu0 %v341
    %407 = vmatpush2.bf16.msra.mxu0 %v340
    %408 = vmatprep.subr.bf16.mxu0 %v339
    %409 = vmatpush2.bf16.msra.mxu0 %v338
    %410 = vmatprep.subr.bf16.mxu0 %v337
    %411 = vmatpush2.bf16.msra.mxu0 %v336
    %412 = vmatprep.subr.bf16.mxu0 %v335
    %413 = vmatpush2.bf16.msra.mxu0 %v334
    %414 = vmatprep.mubr.bf16.mxu0 %v177
    %415 = vmatmul.mubr.bf16.gmra.mxu0 %v176
    %v416 = vpop.f32.mrf.mxu0
    %v417 = vadd.f32 %v215, %v416
    %v418 = vpop.f32.mrf.mxu0
    %v419 = vadd.f32 %v219, %v418
    %v420 = vpop.f32.mrf.mxu0
    %v421 = vadd.f32 %v215, %v420
    %v422 = vpop.f32.mrf.mxu0
    %v423 = vadd.f32 %v219, %v422
    %424 = vdwg.mxu0
    %v425 = vmax.f32 %v417, 0.0
    %v426 = vmax.f32 %v419, 0.0
    %v427 = vmax.f32 %v421, 0.0
    %v428 = vmax.f32 %v423, 0.0
    %v429 = vpack.c.bf16 %v100, %v99
    %v430 = vld [vmem:[%s6] sm:$0xff]
    %v432 = vunpack.c.l.b16 %v430
    %v433 = vunpack.c.h.b16 %v430
    %v434 = vpack.c.b16 %v432, %v432
    %v435 = vpack.c.b16 %v433, %v433
    %vm436 = vcmask 64512
    %v438 = vsel %vm436, %v429, 0
    %vm440 = vcmask 1043456
    %v442 = vsel %vm440, %v434, 0
    %v445 = vsel %vm440, %v435, 0
    %447 = vmatprep.subr.bf16.mxu0 0
    %448 = vmatpush1.bf16.msra.mxu0 0
    %449 = vmatprep.subr.bf16.mxu0 0
    %450 = vmatpush1.bf16.msra.mxu0 0
    %451 = vmatprep.subr.bf16.mxu0 0
    %452 = vmatpush1.bf16.msra.mxu0 0
    %453 = vmatprep.subr.bf16.mxu0 0
    %454 = vmatpush1.bf16.msra.mxu0 0
    %455 = vmatprep.subr.bf16.mxu0 0
    %456 = vmatpush1.bf16.msra.mxu0 0
    %457 = vmatprep.subr.bf16.mxu0 0
    %458 = vmatpush1.bf16.msra.mxu0 0
    %459 = vmatprep.subr.bf16.mxu0 0
    %460 = vmatpush1.bf16.msra.mxu0 0
    %461 = vmatprep.subr.bf16.mxu0 %v445
    %462 = vmatpush1.bf16.msra.mxu0 %v442
    %463 = vmatprep.subr.bf16.mxu0 0
    %464 = vmatpush2.bf16.msra.mxu0 0
    %465 = vmatprep.subr.bf16.mxu0 0
    %466 = vmatpush2.bf16.msra.mxu0 0
    %467 = vmatprep.subr.bf16.mxu0 0
    %468 = vmatpush2.bf16.msra.mxu0 0
    %469 = vmatprep.subr.bf16.mxu0 0
    %470 = vmatpush2.bf16.msra.mxu0 0
    %471 = vmatprep.subr.bf16.mxu0 0
    %472 = vmatpush2.bf16.msra.mxu0 0
    %473 = vmatprep.subr.bf16.mxu0 0
    %474 = vmatpush2.bf16.msra.mxu0 0
    %475 = vmatprep.subr.bf16.mxu0 0
    %476 = vmatpush2.bf16.msra.mxu0 0
    %477 = vmatprep.subr.bf16.mxu0 0
    %478 = vmatpush2.bf16.msra.mxu0 0
    %479 = vmatprep.mubr.bf16.mxu0 0
    %480 = vmatmul.mubr.bf16.gmra.mxu0 %v438
    %v481 = vpop.f32.mrf.mxu0
    %v482 = vadd.f32 0.0, %v481
    %v483 = vpop.f32.mrf.mxu0
    %v484 = vadd.f32 0.0, %v483
    %v485 = vpop.f32.mrf.mxu0
    %v486 = vadd.f32 0.0, %v485
    %v487 = vpop.f32.mrf.mxu0
    %v488 = vadd.f32 0.0, %v487
    %489 = vdwg.mxu0
    %v490 = vmul.f32 %v425, %v482
    %v491 = vmul.f32 %v426, %v484
    %v492 = vmul.f32 %v427, %v486
    %v493 = vmul.f32 %v428, %v488
    %v494 = vadd.f32 %v490, %v491
    %495 = vadd.xlane.f32.xlu0 %v494
    %v496 = vpop.xlane.xlu0 %495
    %v497 = vadd.f32 %v492, %v493
    %498 = vadd.xlane.f32.xlu0 %v497
    %v499 = vpop.xlane.xlu0 %498
    %v500 = vld [vmem:[%s7] sm:$0x1]
    %v502 = vlaneseq
    %v503 = vshrl.u32 %v502, 7
    %v504 = vsub.s32 0, %v503
    %v505 = vrot.slane %v500, %v504
    %v507 = vmul.f32 %v99, %v505
    %v508 = vmul.f32 %v100, %v505
    %v509 = vsel %vm436, %v507, 0.0
    %510 = vadd.xlane.f32.xlu0 %v509
    %v511 = vpop.xlane.xlu0 %510
    %v512 = vsel %vm436, %v508, 0.0
    %513 = vadd.xlane.f32.xlu0 %v512
    %v514 = vpop.xlane.xlu0 %513
    %v515 = vadd.f32 %v496, %v511
    %v516 = vadd.f32 %v499, %v514
    %v519 = vlaneseq
    %v520 = vand.u32 %v519, 127
    %v521 = vlaneseq
    %v522 = vshrl.u32 %v521, 7
    %v523 = vsub.s32 %v520, %v522
    %v524 = vrot.slane %v515, %v523
    %v525 = vadd.s32 %v520, 4294967288
    %v526 = vlaneseq
    %v527 = vshrl.u32 %v526, 7
    %v528 = vsub.s32 %v525, %v527
    %v529 = vrot.slane %v516, %v528
    %vm530 = vcmask 130112
    %v531 = vsel %vm530, %v529, %v524
    %vm533 = vcmask 122880
    %534 = vst.msk [vmem:[%s8] sm:$0x1] %vm533, %v531
    // Predicated region
    $region54: #{c_critic_forward.1} parent=1 // pred_check
      _
    $region55: #{c_critic_forward.1} parent=1 // pred_check_branch
      %536 = sbr.rel (0) target = $region57
    $region56: #{c_critic_forward.1} parent=1 // pred_region
      _
    $region57: #{c_critic_forward.1} parent=1 // pred_fallthru
      _
    // Predicated region
    $region58: #{c_critic_forward.1} parent=1 // pred_check
      _
    $region59: #{c_critic_forward.1} parent=1 // pred_check_branch
      %538 = sbr.rel (0) target = $region61
    $region60: #{c_critic_forward.1} parent=1 // pred_region
      _
    $region61: #{c_critic_forward.1} parent=1 // pred_fallthru
      _
    %539 = vsyncpa [#allocation3], 1
    %540 = vsyncpa [#allocation5], 1
    %541 = vsyncpa [#allocation8], 1

</llo_original>
